<compile_context>
chip_gen: v6e
topology: v6e:2x2x1
jax: 0.10.0
libtpu: 0.0.40
codegen_flags: <defaults>
</compile_context>

<pallas_src>
import jax
import jax.numpy as jnp
from jax import lax
from jax.experimental import pallas as pl
from jax.experimental.pallas import tpu as pltpu


def arc_margin_kernel(f_ref, w_ref, o_ref, wn_ref):
    # Normalize + transpose this weight tile only once (first batch tile of the
    # inner, sequentially-executed loop); cache as (K, tn) in the compute dtype.
    # NOTE: this guard is only valid while grid axis 1 (batch) stays innermost
    # and "arbitrary".
    @pl.when(pl.program_id(1) == 0)
    def _():
        w = w_ref[...].astype(jnp.float32)                      # (tn, K)
        # x / max(||x||, 1e-12)  ==  x * rsqrt(max(||x||^2, 1e-24))
        inv = lax.rsqrt(jnp.maximum(jnp.sum(w * w, axis=-1, keepdims=True), 1e-24))
        wn_ref[...] = (w * inv).T.astype(wn_ref.dtype)          # (K, tn)

    # Steady state: pure MXU matmul (features already normalized in the wrapper),
    # f32 accumulation.
    o_ref[...] = jnp.dot(
        f_ref[...], wn_ref[...], preferred_element_type=jnp.float32
    ).astype(o_ref.dtype)


def _round_up(x, m):
    return ((x + m - 1) // m) * m


def _pick_tile_m(batch, tm_max):
    """Batch tile: minimize padding so the last tile is mostly real rows."""
    b8 = _round_up(batch, 8)
    if b8 <= tm_max:
        return b8, b8
    n_tiles = -(-b8 // tm_max)
    tm = _round_up(-(-b8 // n_tiles), 8)
    return tm, tm * n_tiles


def _pick_tile_n(out_p, tn_max):
    """Class tile: 128-multiple divisor of out_p (weight pad <=127 rows);
    prefer >=2 tiles so the parallel grid axis can feed both v7x TensorCores."""
    lanes = out_p // 128
    max_d = max(1, tn_max // 128)

    def best_divisor(cap):
        best = 1
        for d in range(1, min(lanes, max(cap, 1)) + 1):
            if lanes % d == 0:
                best = d
        return best

    d = best_divisor(max_d)
    if lanes >= 2 and lanes // d < 2:
        d = best_divisor(lanes // 2)
    return d * 128


def arc_margin_product(features, weight, *, tm=512, tn=2048,
                       compute_dtype=jnp.bfloat16, out_dtype=jnp.float32):
    """cosine = normalize(features) @ normalize(weight).T, tiled over (B, out_features)."""
    B, in_f = features.shape
    out_f, in_f_w = weight.shape
    assert in_f == in_f_w, "feature dim mismatch"

    comp_b = jnp.dtype(compute_dtype).itemsize
    out_b = jnp.dtype(out_dtype).itemsize

    # ---- tile selection ----------------------------------------------------
    tm, B_p = _pick_tile_m(B, tm)
    out_p = _round_up(out_f, 128)

    # Keep the double-buffered pipeline footprint within ~36 MiB: safe on v7x's
    # 64 MiB/TC (with headroom for the once-per-tile normalize temporaries) and
    # tiny relative to v5e/v6e's 128 MiB.
    budget = 36 << 20
    avail = budget - 2 * tm * in_f * comp_b
    denom = 3 * in_f * comp_b + 2 * tm * out_b   # bytes per unit of tn
    tn_budget = max(128, (max(avail, 0) // max(denom, 1)) // 128 * 128)
    tn = _pick_tile_n(out_p, min(tn, tn_budget))

    grid = (out_p // tn, B_p // tm)              # weight tiles outer, batch inner

    pipeline_bytes = (2 * tm * in_f * comp_b     # features double buffer
                      + 2 * tn * in_f * comp_b   # weight double buffer
                      + 2 * tm * tn * out_b      # output double buffer
                      + tn * in_f * comp_b)      # cached w_n^T scratch
    # Headroom for the f32 normalize/transpose temporaries; cap at 48 MiB (v7x).
    vmem_limit = int(min(48 << 20,
                         max(32 << 20,
                             pipeline_bytes + 2 * tn * in_f * 4 + (2 << 20))))

    # ---- data prep (cheap, fused XLA passes) --------------------------------
    # Features: normalize in f32 once, cast to compute dtype, pad batch (<=7/tile).
    f32 = features.astype(jnp.float32)
    f_n = f32 / jnp.maximum(jnp.linalg.norm(f32, axis=-1, keepdims=True), 1e-12)
    f_n = f_n.astype(compute_dtype)
    if B_p != B:
        f_n = jnp.pad(f_n, ((0, B_p - B), (0, 0)))

    # Weight: hand it to the kernel already in the compute dtype (no-op if params
    # are stored in bf16).  Pad is <=127 rows since tn divides round_up(out_f,128).
    w_c = weight.astype(compute_dtype)
    if out_p != out_f:
        w_c = jnp.pad(w_c, ((0, out_p - out_f), (0, 0)))

    # ---- kernel --------------------------------------------------------------
    out = pl.pallas_call(
        arc_margin_kernel,
        out_shape=jax.ShapeDtypeStruct((B_p, out_p), out_dtype),
        grid_spec=pltpu.PrefetchScalarGridSpec(
            num_scalar_prefetch=0,
            grid=grid,
            in_specs=[
                pl.BlockSpec((tm, in_f), lambda j, i: (i, 0)),  # pre-normalized features
                pl.BlockSpec((tn, in_f), lambda j, i: (j, 0)),  # weight tile (compute dtype)
            ],
            out_specs=pl.BlockSpec((tm, tn), lambda j, i: (i, j)),
            scratch_shapes=[pltpu.VMEM((in_f, tn), compute_dtype)],  # cached w_n^T
        ),
        compiler_params=pltpu.CompilerParams(
            dimension_semantics=("parallel", "arbitrary"),
            vmem_limit_bytes=vmem_limit,
        ),
    )(f_n, w_c)

    if B_p != B or out_p != out_f:
        out = out[:B, :out_f]
    return out


def xavier_uniform(key, out_features, in_features):
    # nn.init.xavier_uniform_: U(-a, a), a = sqrt(6 / (fan_in + fan_out))
    bound = (6.0 / (in_features + out_features)) ** 0.5
    return jax.random.uniform(
        key, (out_features, in_features), jnp.float32, -bound, bound
    )


if __name__ == "__main__":
    B, in_features, out_features = 8, 32, 16

    key = jax.random.PRNGKey(0)
    k_feat, k_w = jax.random.split(key)

    features = jax.random.normal(k_feat, (B, in_features), jnp.float32)
    weight = xavier_uniform(k_w, out_features, in_features)

    # Pure-JAX reference (matches F.normalize + F.linear).
    f_ref = features / jnp.maximum(
        jnp.linalg.norm(features, axis=-1, keepdims=True), 1e-12
    )
    w_ref = weight / jnp.maximum(
        jnp.linalg.norm(weight, axis=-1, keepdims=True), 1e-12
    )
    ref = f_ref @ w_ref.T

    # f32 MXU operands: tight correctness check.
    cos_f32 = arc_margin_product(features, weight, compute_dtype=jnp.float32)
    jax.block_until_ready(cos_f32)
    assert cos_f32.shape == (B, out_features)
    assert jnp.allclose(cos_f32, ref, atol=1e-5, rtol=1e-5)

    # bf16 MXU operands (default fast path): f32 accumulate, looser tolerance.
    cos_bf16 = arc_margin_product(features, weight)
    jax.block_until_ready(cos_bf16)
    assert cos_bf16.shape == (B, out_features)
    assert jnp.allclose(cos_bf16, ref, atol=2e-2, rtol=2e-2)

    print("KERNEL_OK")
</pallas_src>

<mosaic_0001>
module attributes {stable_mosaic.version = 11 : i64} {
  func.func @arc_margin_kernel(%arg0: i32, %arg1: i32, %arg2: memref<8x32xf32, #tpu.memory_space<vmem>>, %arg3: memref<128x32xf32, #tpu.memory_space<vmem>>, %arg4: memref<8x128xf32, #tpu.memory_space<vmem>>, %arg5: memref<32x128xf32, #tpu.memory_space<vmem>>) attributes {dimension_semantics = [#tpu.dimension_semantics<parallel>, #tpu.dimension_semantics<arbitrary>], iteration_bounds = array<i64: 1, 1>, scalar_prefetch = 0 : i64, scratch_operands = 1 : i64, tpu.core_type = #tpu.core_type<tc>, window_params = [{transform_indices = @transform_0, window_bounds = array<i64: 8, 32>}, {transform_indices = @transform_1, window_bounds = array<i64: 128, 32>}, {transform_indices = @transform_2, window_bounds = array<i64: 8, 128>}]} {
    %c0_i32 = arith.constant 0 : i32
    %0 = arith.cmpi eq, %arg1, %c0_i32 : i32
    %1 = arith.extui %0 : i1 to i32
    %c0_i32_0 = arith.constant 0 : i32
    %2 = arith.cmpi ne, %1, %c0_i32_0 : i32
    scf.if %2 {
      %c0_6 = arith.constant 0 : index
      %c0_7 = arith.constant 0 : index
      %7 = vector.load %arg3[%c0_6, %c0_7] : memref<128x32xf32, #tpu.memory_space<vmem>>, vector<128x32xf32>
      %8 = arith.mulf %7, %7 : vector<128x32xf32>
      %cst_8 = arith.constant dense<0.000000e+00> : vector<128xf32>
      %9 = vector.multi_reduction <add>, %8, %cst_8 [1] : vector<128x32xf32> to vector<128xf32>
      %10 = vector.shape_cast %9 : vector<128xf32> to vector<128x1xf32>
      %cst_9 = arith.constant 1.000000e-24 : f32
      %11 = vector.broadcast %cst_9 : f32 to vector<128x1xf32>
      %12 = arith.maximumf %10, %11 : vector<128x1xf32>
      %13 = math.rsqrt %12 : vector<128x1xf32>
      %14 = vector.broadcast %13 : vector<128x1xf32> to vector<128x32xf32>
      %15 = arith.mulf %7, %14 : vector<128x32xf32>
      %16 = tpu.transpose %15, [1, 0] : vector<128x32xf32> -> vector<32x128xf32>
      %c0_10 = arith.constant 0 : index
      %c0_11 = arith.constant 0 : index
      %17 = vector.load %arg5[%c0_10, %c0_11] : memref<32x128xf32, #tpu.memory_space<vmem>>, vector<32x128xf32>
      tpu.vector_store %arg5[%c0_10, %c0_11], %16 {strides = array<i32>} : memref<32x128xf32, #tpu.memory_space<vmem>>, vector<32x128xf32>,
    } else {
    }
    %c0 = arith.constant 0 : index
    %c0_1 = arith.constant 0 : index
    %3 = vector.load %arg2[%c0, %c0_1] : memref<8x32xf32, #tpu.memory_space<vmem>>, vector<8x32xf32>
    %c0_2 = arith.constant 0 : index
    %c0_3 = arith.constant 0 : index
    %4 = vector.load %arg5[%c0_2, %c0_3] : memref<32x128xf32, #tpu.memory_space<vmem>>, vector<32x128xf32>
    %cst = arith.constant dense<0.000000e+00> : vector<8x128xf32>
    %5 = tpu.matmul %3, %4, %cst {dimension_numbers = #tpu.dot_dimension_numbers<[1], [0], [0], [1], [0, 0, 1, 1], [], []>} : vector<8x32xf32>, vector<32x128xf32>, vector<8x128xf32> -> vector<8x128xf32>
    %c0_4 = arith.constant 0 : index
    %c0_5 = arith.constant 0 : index
    %6 = vector.load %arg4[%c0_4, %c0_5] : memref<8x128xf32, #tpu.memory_space<vmem>>, vector<8x128xf32>
    tpu.vector_store %arg4[%c0_4, %c0_5], %5 {strides = array<i32>} : memref<8x128xf32, #tpu.memory_space<vmem>>, vector<8x128xf32>,
    return
  }
  func.func @transform_0(%arg0: i32, %arg1: i32) -> (i32, i32) {
    %c0_i32 = arith.constant 0 : i32
    %c0_i32_0 = arith.constant 0 : i32
    return %arg1, %c0_i32 : i32, i32
  }
  func.func @transform_1(%arg0: i32, %arg1: i32) -> (i32, i32) {
    %c0_i32 = arith.constant 0 : i32
    %c0_i32_0 = arith.constant 0 : i32
    return %arg0, %c0_i32 : i32, i32
  }
  func.func @transform_2(%arg0: i32, %arg1: i32) -> (i32, i32) {
    %c0_i32 = arith.constant 0 : i32
    return %arg1, %arg0 : i32, i32
  }
}

</mosaic_0001>

<llo_original>
// kernel: tpu_custom_call.1
$region0: #{tpu_custom_call.1}
  #allocation0 [shape = 'u32[]', space=smem, size = 0x4, offset = 0x4, fixed_abs, tag = 'smem constant byte address 0x4 - core index']
  #allocation1 [shape = 'u32[144,128]{1,0:T(1,128)}', space=vmem, size = 0x12000, scoped, tag = 'internal scratch']
  #allocation2 [shape = 'f32[32,128]{1,0:T(8,128)}', space=vmem, size = 0x4000, scoped, tag = 'scratch operand']
  %s0 = inlined_call_operand.vmem [shape: f32[8,32], index: 0, kind: input, shape index: {}]
  %s1 = inlined_call_operand.vmem [shape: f32[128,32], index: 1, kind: input, shape index: {}]
  %s2 = inlined_call_operand.hbm [shape: f32[8,128], index: 2, kind: output, shape index: {}]
  %s3 = sld [smem:[#allocation0]]
  $region22: #{tpu_custom_call.1} parent=0
    _
  %s5 = ssub.s32 1, %s3
  %s6 = scalar_select 0, %s5, %s3
  $region1: #{tpu_custom_call.1} parent=0
    #allocation3 [shape = 'u8[4096]{0}', space=vmem, size = 0x1000, scoped, tag = 'output window, operand 0, single buffered']
    #allocation4 [shape = 's32[1]{0}', space=sflag, size = 0x4, scoped, tag = 'scoped memory for tpu_custom_call.1']
    %7 = vsyncpa [#allocation4], 0
    // Predicated region
    $region2: #{tpu_custom_call.1} parent=1 // pred_check
      _
    $region3: #{tpu_custom_call.1} parent=1 // pred_check_branch
      %9 = sbr.rel (0) target = $region5
    $region4: #{tpu_custom_call.1} parent=1 // pred_region
      _
    $region5: #{tpu_custom_call.1} parent=1 // pred_fallthru
      _
    // Predicated region
    $region6: #{tpu_custom_call.1} parent=1 // pred_check
      _
    $region7: #{tpu_custom_call.1} parent=1 // pred_check_branch
      %11 = sbr.rel (0) target = $region9
    $region8: #{tpu_custom_call.1} parent=1 // pred_region
      _
    $region9: #{tpu_custom_call.1} parent=1 // pred_fallthru
      _
    %p12 = scmp.eq.s32.totalorder 0, 0
    // Predicated region
    $region10: #{tpu_custom_call.1} parent=1 // pred_check
      %p13 = pneg %p12
    $region11: #{tpu_custom_call.1} parent=1 // pred_check_branch
      %15 = sbr.rel (%p13) target = $region13
    $region12: #{tpu_custom_call.1} parent=1 // pred_region
      %v16 = vld [vmem:[%s1] sm:$0xff]
      %v17 = vld [vmem:[%s1 + $0x8] sm:$0xff]
      %v18 = vld [vmem:[%s1 + $0x10] sm:$0xff]
      %v19 = vld [vmem:[%s1 + $0x18] sm:$0xff]
      %v20 = vld [vmem:[%s1 + $0x20] sm:$0xff]
      %v21 = vld [vmem:[%s1 + $0x28] sm:$0xff]
      %v22 = vld [vmem:[%s1 + $0x30] sm:$0xff]
      %v23 = vld [vmem:[%s1 + $0x38] sm:$0xff]
      %v24 = vld [vmem:[%s1 + $0x40] sm:$0xff]
      %v25 = vld [vmem:[%s1 + $0x48] sm:$0xff]
      %v26 = vld [vmem:[%s1 + $0x50] sm:$0xff]
      %v27 = vld [vmem:[%s1 + $0x58] sm:$0xff]
      %v28 = vld [vmem:[%s1 + $0x60] sm:$0xff]
      %v29 = vld [vmem:[%s1 + $0x68] sm:$0xff]
      %v30 = vld [vmem:[%s1 + $0x70] sm:$0xff]
      %v31 = vld [vmem:[%s1 + $0x78] sm:$0xff]
      %v32 = vmul.f32 %v16, %v16
      %v33 = vmul.f32 %v17, %v17
      %v34 = vmul.f32 %v18, %v18
      %v35 = vmul.f32 %v19, %v19
      %v36 = vmul.f32 %v20, %v20
      %v37 = vmul.f32 %v21, %v21
      %v38 = vmul.f32 %v22, %v22
      %v39 = vmul.f32 %v23, %v23
      %v40 = vmul.f32 %v24, %v24
      %v41 = vmul.f32 %v25, %v25
      %v42 = vmul.f32 %v26, %v26
      %v43 = vmul.f32 %v27, %v27
      %v44 = vmul.f32 %v28, %v28
      %v45 = vmul.f32 %v29, %v29
      %v46 = vmul.f32 %v30, %v30
      %v47 = vmul.f32 %v31, %v31
      %vm48 = vcmask 261120
      %v49 = vsel %vm48, %v32, 0.0
      %50 = vadd.xlane.f32.xlu0 %v49
      %v51 = vpop.xlane.xlu0 %50
      %v52 = vsel %vm48, %v33, 0.0
      %53 = vadd.xlane.f32.xlu0 %v52
      %v54 = vpop.xlane.xlu0 %53
      %v55 = vsel %vm48, %v34, 0.0
      %56 = vadd.xlane.f32.xlu0 %v55
      %v57 = vpop.xlane.xlu0 %56
      %v58 = vsel %vm48, %v35, 0.0
      %59 = vadd.xlane.f32.xlu0 %v58
      %v60 = vpop.xlane.xlu0 %59
      %v61 = vsel %vm48, %v36, 0.0
      %62 = vadd.xlane.f32.xlu0 %v61
      %v63 = vpop.xlane.xlu0 %62
      %v64 = vsel %vm48, %v37, 0.0
      %65 = vadd.xlane.f32.xlu0 %v64
      %v66 = vpop.xlane.xlu0 %65
      %v67 = vsel %vm48, %v38, 0.0
      %68 = vadd.xlane.f32.xlu0 %v67
      %v69 = vpop.xlane.xlu0 %68
      %v70 = vsel %vm48, %v39, 0.0
      %71 = vadd.xlane.f32.xlu0 %v70
      %v72 = vpop.xlane.xlu0 %71
      %v73 = vsel %vm48, %v40, 0.0
      %74 = vadd.xlane.f32.xlu0 %v73
      %v75 = vpop.xlane.xlu0 %74
      %v76 = vsel %vm48, %v41, 0.0
      %77 = vadd.xlane.f32.xlu0 %v76
      %v78 = vpop.xlane.xlu0 %77
      %v79 = vsel %vm48, %v42, 0.0
      %80 = vadd.xlane.f32.xlu0 %v79
      %v81 = vpop.xlane.xlu0 %80
      %v82 = vsel %vm48, %v43, 0.0
      %83 = vadd.xlane.f32.xlu0 %v82
      %v84 = vpop.xlane.xlu0 %83
      %v85 = vsel %vm48, %v44, 0.0
      %86 = vadd.xlane.f32.xlu0 %v85
      %v87 = vpop.xlane.xlu0 %86
      %v88 = vsel %vm48, %v45, 0.0
      %89 = vadd.xlane.f32.xlu0 %v88
      %v90 = vpop.xlane.xlu0 %89
      %v91 = vsel %vm48, %v46, 0.0
      %92 = vadd.xlane.f32.xlu0 %v91
      %v93 = vpop.xlane.xlu0 %92
      %v94 = vsel %vm48, %v47, 0.0
      %95 = vadd.xlane.f32.xlu0 %v94
      %v96 = vpop.xlane.xlu0 %95
      %v97 = vmax.f32 %v51, 1e-24
      %v98 = vmax.f32 %v54, 1e-24
      %v99 = vmax.f32 %v57, 1e-24
      %v100 = vmax.f32 %v60, 1e-24
      %v101 = vmax.f32 %v63, 1e-24
      %v102 = vmax.f32 %v66, 1e-24
      %v103 = vmax.f32 %v69, 1e-24
      %v104 = vmax.f32 %v72, 1e-24
      %v105 = vmax.f32 %v75, 1e-24
      %v106 = vmax.f32 %v78, 1e-24
      %v107 = vmax.f32 %v81, 1e-24
      %v108 = vmax.f32 %v84, 1e-24
      %v109 = vmax.f32 %v87, 1e-24
      %v110 = vmax.f32 %v90, 1e-24
      %v111 = vmax.f32 %v93, 1e-24
      %v112 = vmax.f32 %v96, 1e-24
      %v113 = vrsqrt.pop %v97
      %v114 = vrsqrt.pop %v98
      %v115 = vrsqrt.pop %v99
      %v116 = vrsqrt.pop %v100
      %v117 = vrsqrt.pop %v101
      %v118 = vrsqrt.pop %v102
      %v119 = vrsqrt.pop %v103
      %v120 = vrsqrt.pop %v104
      %v121 = vrsqrt.pop %v105
      %v122 = vrsqrt.pop %v106
      %v123 = vrsqrt.pop %v107
      %v124 = vrsqrt.pop %v108
      %v125 = vrsqrt.pop %v109
      %v126 = vrsqrt.pop %v110
      %v127 = vrsqrt.pop %v111
      %v128 = vrsqrt.pop %v112
      %v129 = vmul.f32 %v16, %v113
      %v130 = vmul.f32 %v17, %v114
      %v131 = vmul.f32 %v18, %v115
      %v132 = vmul.f32 %v19, %v116
      %v133 = vmul.f32 %v20, %v117
      %v134 = vmul.f32 %v21, %v118
      %v135 = vmul.f32 %v22, %v119
      %v136 = vmul.f32 %v23, %v120
      %v137 = vmul.f32 %v24, %v121
      %v138 = vmul.f32 %v25, %v122
      %v139 = vmul.f32 %v26, %v123
      %v140 = vmul.f32 %v27, %v124
      %v141 = vmul.f32 %v28, %v125
      %v142 = vmul.f32 %v29, %v126
      %v143 = vmul.f32 %v30, %v127
      %v144 = vmul.f32 %v31, %v128
      %145 = vxpose.xlu0.b32.start [1/16] %v129, 128
      %146 = vxpose.xlu0.b32.cont [2/16] %v130, 128
      %147 = vxpose.xlu0.b32.cont [3/16] %v131, 128
      %148 = vxpose.xlu0.b32.cont [4/16] %v132, 128
      %149 = vxpose.xlu0.b32.cont [5/16] %v133, 128
      %150 = vxpose.xlu0.b32.cont [6/16] %v134, 128
      %151 = vxpose.xlu0.b32.cont [7/16] %v135, 128
      %152 = vxpose.xlu0.b32.cont [8/16] %v136, 128
      %153 = vxpose.xlu0.b32.cont [9/16] %v137, 128
      %154 = vxpose.xlu0.b32.cont [10/16] %v138, 128
      %155 = vxpose.xlu0.b32.cont [11/16] %v139, 128
      %156 = vxpose.xlu0.b32.cont [12/16] %v140, 128
      %157 = vxpose.xlu0.b32.cont [13/16] %v141, 128
      %158 = vxpose.xlu0.b32.cont [14/16] %v142, 128
      %159 = vxpose.xlu0.b32.cont [15/16] %v143, 128
      %160 = vxpose.xlu0.b32.end [16/16] %v144, 128
      %v161 = vpop.trf.xlu0
      %v162 = vpop.trf.xlu0
      %v163 = vpop.trf.xlu0
      %v164 = vpop.trf.xlu0
      %v165 = vpop.trf.xlu0
      %v166 = vpop.trf.xlu0
      %v167 = vpop.trf.xlu0
      %v168 = vpop.trf.xlu0
      %v169 = vpop.trf.xlu0
      %v170 = vpop.trf.xlu0
      %v171 = vpop.trf.xlu0
      %v172 = vpop.trf.xlu0
      %v173 = vpop.trf.xlu0
      %v174 = vpop.trf.xlu0
      %v175 = vpop.trf.xlu0
      %v176 = vpop.trf.xlu0
      %177 = vst [vmem:[#allocation2] sm:$0xff] %v161
      %178 = vst [vmem:[#allocation2 + $0x8] sm:$0xff] %v162
      %179 = vst [vmem:[#allocation2 + $0x10] sm:$0xff] %v163
      %180 = vst [vmem:[#allocation2 + $0x18] sm:$0xff] %v164
    $region13: #{tpu_custom_call.1} parent=1 // pred_fallthru
      _
    %v181 = vld [vmem:[%s0] sm:$0xff]
    %v182 = vld [vmem:[#allocation2] sm:$0xff]
    %v183 = vld [vmem:[#allocation2 + $0x8] sm:$0xff]
    %v184 = vld [vmem:[#allocation2 + $0x10] sm:$0xff]
    %v185 = vld [vmem:[#allocation2 + $0x18] sm:$0xff]
    %vm186 = vcmask 261120
    %v188 = vsel %vm186, %v181, 0
    %190 = vmatprep.subr.mxu0 0.0
    %191 = vmatpush1.msra.mxu0 0.0
    %192 = vmatprep.subr.mxu0 0.0
    %193 = vmatpush1.msra.mxu0 0.0
    %194 = vmatprep.subr.mxu0 0.0
    %195 = vmatpush1.msra.mxu0 0.0
    %196 = vmatprep.subr.mxu0 0.0
    %197 = vmatpush1.msra.mxu0 0.0
    %198 = vmatprep.subr.mxu0 0.0
    %199 = vmatpush1.msra.mxu0 0.0
    %200 = vmatprep.subr.mxu0 0.0
    %201 = vmatpush1.msra.mxu0 0.0
    %202 = vmatprep.subr.mxu0 0.0
    %203 = vmatpush1.msra.mxu0 0.0
    %204 = vmatprep.subr.mxu0 0.0
    %205 = vmatpush1.msra.mxu0 0.0
    %206 = vmatprep.subr.mxu0 0.0
    %207 = vmatpush1.msra.mxu0 0.0
    %208 = vmatprep.subr.mxu0 0.0
    %209 = vmatpush1.msra.mxu0 0.0
    %210 = vmatprep.subr.mxu0 0.0
    %211 = vmatpush1.msra.mxu0 0.0
    %212 = vmatprep.subr.mxu0 0.0
    %213 = vmatpush1.msra.mxu0 0.0
    %214 = vmatprep.subr.mxu0 0.0
    %215 = vmatpush1.msra.mxu0 %v185
    %216 = vmatprep.subr.mxu0 0.0
    %217 = vmatpush1.msra.mxu0 %v184
    %218 = vmatprep.subr.mxu0 0.0
    %219 = vmatpush1.msra.mxu0 %v183
    %220 = vmatprep.subr.mxu0 0.0
    %221 = vmatpush1.msra.mxu0 %v182
    %222 = vmatprep.subr.mxu0 0.0
    %223 = vmatpush2.msra.mxu0 0.0
    %224 = vmatprep.subr.mxu0 0.0
    %225 = vmatpush2.msra.mxu0 0.0
    %226 = vmatprep.subr.mxu0 0.0
    %227 = vmatpush2.msra.mxu0 0.0
    %228 = vmatprep.subr.mxu0 0.0
    %229 = vmatpush2.msra.mxu0 0.0
    %230 = vmatprep.subr.mxu0 0.0
    %231 = vmatpush2.msra.mxu0 0.0
    %232 = vmatprep.subr.mxu0 0.0
    %233 = vmatpush2.msra.mxu0 0.0
    %234 = vmatprep.subr.mxu0 0.0
    %235 = vmatpush2.msra.mxu0 0.0
    %236 = vmatprep.subr.mxu0 0.0
    %237 = vmatpush2.msra.mxu0 0.0
    %238 = vmatprep.subr.mxu0 0.0
    %239 = vmatpush2.msra.mxu0 0.0
    %240 = vmatprep.subr.mxu0 0.0
    %241 = vmatpush2.msra.mxu0 0.0
    %242 = vmatprep.subr.mxu0 0.0
    %243 = vmatpush2.msra.mxu0 0.0
    %244 = vmatprep.subr.mxu0 0.0
    %245 = vmatpush2.msra.mxu0 0.0
    %246 = vmatprep.subr.mxu0 0.0
    %247 = vmatpush2.msra.mxu0 0.0
    %248 = vmatprep.subr.mxu0 0.0
    %249 = vmatpush2.msra.mxu0 0.0
    %250 = vmatprep.subr.mxu0 0.0
    %251 = vmatpush2.msra.mxu0 0.0
    %252 = vmatprep.subr.mxu0 0.0
    %253 = vmatpush2.msra.mxu0 0.0
    %254 = vmatprep.mubr.f32.mxu0 0.0
    %255 = vmatmul.mubr.f32.gmra.mxu0 %v188
    %v256 = vpop.f32.mrf.mxu0
    %v257 = vadd.f32 0.0, %v256
    %v258 = vpop.f32.mrf.mxu0
    %259 = vdwg.mxu0
    %260 = vst [vmem:[#allocation3] sm:$0xff] %v257
    // Predicated region
    $region14: #{tpu_custom_call.1} parent=1 // pred_check
      _
    $region15: #{tpu_custom_call.1} parent=1 // pred_check_branch
      %262 = sbr.rel (0) target = $region17
    $region16: #{tpu_custom_call.1} parent=1 // pred_region
      %s264 = ssub.s32 128, 128
      %265 = vsyncadd [#allocation4], %s264
      %s267 = sshll.u32 [#allocation3], 4
      %s268 = int_to_ptr.vmem [resolvable:$true] %s267
      %270 = dma.vmem_to_hbm [thread:$0]  %s268, 128, %s2, [#allocation4]
    $region17: #{tpu_custom_call.1} parent=1 // pred_fallthru
      _
    // Predicated region
    $region18: #{tpu_custom_call.1} parent=1 // pred_check
      _
    $region19: #{tpu_custom_call.1} parent=1 // pred_check_branch
      %272 = sbr.rel (0) target = $region21
    $region20: #{tpu_custom_call.1} parent=1 // pred_region
      %273 = dma.done [#allocation4], 128
    $region21: #{tpu_custom_call.1} parent=1 // pred_fallthru
      _
    %274 = vsyncpa [#allocation4], 1

</llo_original>
